<compile_context>
chip_gen: v5e
topology: v5e:2x2
jax: 0.10.0
libtpu: 0.0.40
codegen_flags: <defaults>
</compile_context>

<pallas_src>
import jax
import jax.numpy as jnp
from jax.experimental import pallas as pl
from jax.experimental.pallas import tpu as pltpu


# ----------------------------- kernels --------------------------------------
def _linear_kernel_bias(x_ref, wt_ref, b_ref, o_ref, acc_ref):
    # x_ref: (tm, tk) bf16   wt_ref: (tk, tn) bf16   b_ref: (1, tn) f32
    # o_ref: (tm, tn) out    acc_ref: VMEM f32 (tm, tn)
    k = pl.program_id(2)

    @pl.when(k == 0)
    def _():
        acc_ref[...] = jnp.zeros_like(acc_ref)

    acc_ref[...] += jnp.dot(x_ref[...], wt_ref[...],
                            preferred_element_type=jnp.float32)

    @pl.when(k == pl.num_programs(2) - 1)
    def _():
        # Bias add + downcast only once, in the K-epilogue (bias already f32).
        o_ref[...] = (acc_ref[...] + b_ref[...]).astype(o_ref.dtype)


def _linear_kernel_nobias(x_ref, wt_ref, o_ref, acc_ref):
    k = pl.program_id(2)

    @pl.when(k == 0)
    def _():
        acc_ref[...] = jnp.zeros_like(acc_ref)

    acc_ref[...] += jnp.dot(x_ref[...], wt_ref[...],
                            preferred_element_type=jnp.float32)

    @pl.when(k == pl.num_programs(2) - 1)
    def _():
        o_ref[...] = acc_ref[...].astype(o_ref.dtype)


# ----------------------------- helpers --------------------------------------
def _round_up(x, m):
    return (x + m - 1) // m * m


def _default_tiles():
    """Per-generation (tm, tn, tk, vmem_limit_bytes) defaults."""
    try:
        kind = jax.devices()[0].device_kind.lower()
    except Exception:  # pragma: no cover - interpret / non-TPU fallback
        kind = ""
    if "v5 lite" in kind or "v5lite" in kind or "v5e" in kind:
        # v5e: ~240 FLOP/B to be compute-bound; bigger tk cuts acc RMW traffic.
        return 512, 512, 1024, 64 * 1024 * 1024
    if "v6" in kind:
        # v6e: needs ~680 FLOP/B; 128 MiB physical VMEM holds big tiles.
        return 1024, 2048, 512, 96 * 1024 * 1024
    if "v7" in kind:
        # v7x: only ~311 FLOP/B needed, 64 MiB physical VMEM -> mid-size tiles.
        return 512, 1024, 512, 48 * 1024 * 1024
    # Unknown generation: conservative, still lane-aligned.
    return 512, 1024, 512, None


def _pick_tk(K, target):
    """Return (tk, K_padded); tk divides K_padded exactly (reduction axis)."""
    target = max(128, (target // 128) * 128)
    if K <= target:
        return K, K                       # single K step, full-extent block
    for cand in range(target, 127, -128):  # ladder: target, target-128, ... 128
        if K % cand == 0:
            return cand, K                 # exact hit, no padding
    Kp = _round_up(K, 128)                 # rare: K not a multiple of 128
    for cand in range(target, 127, -128):
        if Kp % cand == 0:
            return cand, Kp
    return 128, _round_up(K, 128)


# ----------------------------- wrapper ---------------------------------------
def linear_normal(x, weight_t, bias=None, *, tm=None, tn=None, tk=None,
                  compute_dtype=jnp.bfloat16, out_dtype=None):
    """F.linear semantics: out[..., n] = sum_k x[..., k] * W[n, k] + bias[n].

    `weight_t` is the pre-transposed weight of shape (in_features, out_features),
    i.e. W^T, stored that way once at parameter-init time.
    """
    K, N = weight_t.shape
    orig_shape = x.shape
    out_dtype = out_dtype or x.dtype
    x2 = x.reshape(-1, K)
    M = x2.shape[0]

    dtm, dtn, dtk, vmem_limit = _default_tiles()
    tm = tm or dtm
    tn = tn or dtn
    tk = tk or dtk

    # bf16 MXU compute (f32 accumulation inside the kernel).
    if compute_dtype is not None:
        x2 = x2.astype(compute_dtype)
        wt = weight_t.astype(compute_dtype)
    else:
        wt = weight_t

    # K (reduction) tile: must divide K exactly; zero-pad only if K % 128 != 0.
    tk_eff, K_pad = _pick_tk(K, tk)
    if K_pad != K:
        # TODO(synk): for odd K, pre-pad weight_t at init to avoid this per-call copy.
        x2 = jnp.pad(x2, ((0, 0), (0, K_pad - K)))
        wt = jnp.pad(wt, ((0, K_pad - K), (0, 0)))

    # M tile: multiple of 8, cdiv grid, Pallas masks the partial edge block.
    tm_eff = _round_up(max(8, min(tm, _round_up(M, 8))), 8)
    # N tile: full-extent for small N, otherwise a multiple of 128 (edge masked).
    tn_eff = N if N <= tn else max(128, (tn // 128) * 128)

    grid = (pl.cdiv(M, tm_eff), pl.cdiv(N, tn_eff), K_pad // tk_eff)

    in_specs = [
        pl.BlockSpec((tm_eff, tk_eff), lambda i, j, k: (i, k)),
        pl.BlockSpec((tk_eff, tn_eff), lambda i, j, k: (k, j)),
    ]
    args = [x2, wt]
    if bias is not None:
        in_specs.append(pl.BlockSpec((1, tn_eff), lambda i, j, k: (0, j)))
        args.append(bias.astype(jnp.float32).reshape(1, N))
        kernel = _linear_kernel_bias
    else:
        kernel = _linear_kernel_nobias

    cost = pl.CostEstimate(
        flops=2 * M * N * K_pad,
        transcendentals=0,
        bytes_accessed=(x2.size * x2.dtype.itemsize
                        + wt.size * wt.dtype.itemsize
                        + M * N * jnp.dtype(out_dtype).itemsize))

    cp_kwargs = dict(dimension_semantics=("parallel", "parallel", "arbitrary"))
    if vmem_limit is not None:
        cp_kwargs["vmem_limit_bytes"] = vmem_limit

    out = pl.pallas_call(
        kernel,
        out_shape=jax.ShapeDtypeStruct((M, N), out_dtype),
        grid=grid,
        in_specs=in_specs,
        out_specs=pl.BlockSpec((tm_eff, tn_eff), lambda i, j, k: (i, j)),
        scratch_shapes=[pltpu.VMEM((tm_eff, tn_eff), jnp.float32)],
        compiler_params=pltpu.CompilerParams(**cp_kwargs),
        cost_estimate=cost,
    )(*args)

    return out.reshape(*orig_shape[:-1], N)


def init_params(key, in_features, out_features, dtype=jnp.float32):
    # torch.nn.init.xavier_normal_: std = gain * sqrt(2/(fan_in+fan_out)), gain=1.
    std = (2.0 / (in_features + out_features)) ** 0.5
    wkey, _ = jax.random.split(key)
    # Store ONLY the pre-transposed weight (K, N) = W^T; iid normal so sampling
    # directly in transposed layout is statistically identical to xavier_normal_.
    weight_t = (jax.random.normal(wkey, (in_features, out_features), jnp.float32)
                * std).astype(dtype)
    bias = jnp.zeros((out_features,), dtype=jnp.float32)  # torch.nn.init.zeros_
    return weight_t, bias


if __name__ == "__main__":
    key = jax.random.PRNGKey(0)
    in_features, out_features = 32, 32
    batch, seq = 2, 8

    kx, kp = jax.random.split(key)
    x = jax.random.normal(kx, (batch, seq, in_features), jnp.float32)
    weight_t, bias = init_params(kp, in_features, out_features)

    out = jax.block_until_ready(linear_normal(x, weight_t, bias))

    # Reference (F.linear semantics): y = x @ W^T + b == x @ weight_t + b.
    ref = (x.reshape(-1, in_features) @ weight_t + bias).reshape(
        batch, seq, out_features)
    assert out.shape == (batch, seq, out_features)
    # bf16 MXU compute vs f32 reference -> loose tolerance.
    assert jnp.allclose(out, ref, atol=2e-2, rtol=2e-2), \
        float(jnp.max(jnp.abs(out - ref)))

    print("KERNEL_OK")
</pallas_src>

<mosaic_0001>
module attributes {stable_mosaic.version = 11 : i64} {
  func.func @_linear_kernel_bias(%arg0: i32, %arg1: i32, %arg2: i32, %arg3: memref<16x32xbf16, #tpu.memory_space<vmem>>, %arg4: memref<32x32xbf16, #tpu.memory_space<vmem>>, %arg5: memref<1x32xf32, #tpu.memory_space<vmem>>, %arg6: memref<16x32xf32, #tpu.memory_space<vmem>>, %arg7: memref<16x32xf32, #tpu.memory_space<vmem>>) attributes {dimension_semantics = [#tpu.dimension_semantics<parallel>, #tpu.dimension_semantics<parallel>, #tpu.dimension_semantics<arbitrary>], iteration_bounds = array<i64: 1, 1, 1>, scalar_prefetch = 0 : i64, scratch_operands = 1 : i64, tpu.core_type = #tpu.core_type<tc>, window_params = [{transform_indices = @transform_0, window_bounds = array<i64: 16, 32>}, {transform_indices = @transform_1, window_bounds = array<i64: 32, 32>}, {transform_indices = @transform_2, window_bounds = array<i64: 1, 32>}, {transform_indices = @transform_3, window_bounds = array<i64: 16, 32>}]} {
    %c0_i32 = arith.constant 0 : i32
    %0 = arith.cmpi eq, %arg2, %c0_i32 : i32
    %1 = arith.extui %0 : i1 to i32
    %c0_i32_0 = arith.constant 0 : i32
    %2 = arith.cmpi ne, %1, %c0_i32_0 : i32
    scf.if %2 {
      %cst_10 = arith.constant 0.000000e+00 : f32
      %12 = vector.broadcast %cst_10 : f32 to vector<16x32xf32>
      %c0_11 = arith.constant 0 : index
      %c0_12 = arith.constant 0 : index
      %13 = vector.load %arg7[%c0_11, %c0_12] : memref<16x32xf32, #tpu.memory_space<vmem>>, vector<16x32xf32>
      tpu.vector_store %arg7[%c0_11, %c0_12], %12 {strides = array<i32>} : memref<16x32xf32, #tpu.memory_space<vmem>>, vector<16x32xf32>,
    } else {
    }
    %c0 = arith.constant 0 : index
    %c0_1 = arith.constant 0 : index
    %3 = vector.load %arg7[%c0, %c0_1] : memref<16x32xf32, #tpu.memory_space<vmem>>, vector<16x32xf32>
    %c0_2 = arith.constant 0 : index
    %c0_3 = arith.constant 0 : index
    %4 = vector.load %arg3[%c0_2, %c0_3] : memref<16x32xbf16, #tpu.memory_space<vmem>>, vector<16x32xbf16>
    %c0_4 = arith.constant 0 : index
    %c0_5 = arith.constant 0 : index
    %5 = vector.load %arg4[%c0_4, %c0_5] : memref<32x32xbf16, #tpu.memory_space<vmem>>, vector<32x32xbf16>
    %cst = arith.constant dense<0.000000e+00> : vector<16x32xf32>
    %6 = tpu.matmul %4, %5, %cst {dimension_numbers = #tpu.dot_dimension_numbers<[1], [0], [0], [1], [0, 0, 1, 1], [], []>} : vector<16x32xbf16>, vector<32x32xbf16>, vector<16x32xf32> -> vector<16x32xf32>
    %7 = arith.addf %3, %6 : vector<16x32xf32>
    %c0_6 = arith.constant 0 : index
    %c0_7 = arith.constant 0 : index
    %8 = vector.load %arg7[%c0_6, %c0_7] : memref<16x32xf32, #tpu.memory_space<vmem>>, vector<16x32xf32>
    tpu.vector_store %arg7[%c0_6, %c0_7], %7 {strides = array<i32>} : memref<16x32xf32, #tpu.memory_space<vmem>>, vector<16x32xf32>,
    %c0_i32_8 = arith.constant 0 : i32
    %9 = arith.cmpi eq, %arg2, %c0_i32_8 : i32
    %10 = arith.extui %9 : i1 to i32
    %c0_i32_9 = arith.constant 0 : i32
    %11 = arith.cmpi ne, %10, %c0_i32_9 : i32
    scf.if %11 {
      %c0_10 = arith.constant 0 : index
      %c0_11 = arith.constant 0 : index
      %12 = vector.load %arg7[%c0_10, %c0_11] : memref<16x32xf32, #tpu.memory_space<vmem>>, vector<16x32xf32>
      %c0_12 = arith.constant 0 : index
      %c0_13 = arith.constant 0 : index
      %13 = vector.load %arg5[%c0_12, %c0_13] : memref<1x32xf32, #tpu.memory_space<vmem>>, vector<1x32xf32>
      %14 = vector.broadcast %13 : vector<1x32xf32> to vector<16x32xf32>
      %15 = arith.addf %12, %14 : vector<16x32xf32>
      %c0_14 = arith.constant 0 : index
      %c0_15 = arith.constant 0 : index
      %16 = vector.load %arg6[%c0_14, %c0_15] : memref<16x32xf32, #tpu.memory_space<vmem>>, vector<16x32xf32>
      tpu.vector_store %arg6[%c0_14, %c0_15], %15 {strides = array<i32>} : memref<16x32xf32, #tpu.memory_space<vmem>>, vector<16x32xf32>,
    } else {
    }
    return
  }
  func.func @transform_0(%arg0: i32, %arg1: i32, %arg2: i32) -> (i32, i32) {
    %c0_i32 = arith.constant 0 : i32
    return %arg0, %arg2 : i32, i32
  }
  func.func @transform_1(%arg0: i32, %arg1: i32, %arg2: i32) -> (i32, i32) {
    %c0_i32 = arith.constant 0 : i32
    return %arg2, %arg1 : i32, i32
  }
  func.func @transform_2(%arg0: i32, %arg1: i32, %arg2: i32) -> (i32, i32) {
    %c0_i32 = arith.constant 0 : i32
    %c0_i32_0 = arith.constant 0 : i32
    return %c0_i32, %arg1 : i32, i32
  }
  func.func @transform_3(%arg0: i32, %arg1: i32, %arg2: i32) -> (i32, i32) {
    %c0_i32 = arith.constant 0 : i32
    return %arg0, %arg1 : i32, i32
  }
}

</mosaic_0001>

<llo_original>
// kernel: tpu_custom_call.1
$region0: #{tpu_custom_call.1}
  #allocation0 [shape = 'u32[]', space=smem, size = 0x4, offset = 0x4, fixed_abs, tag = 'smem constant byte address 0x4 - core index']
  #allocation1 [shape = 'u32[72,128]{1,0:T(1,128)}', space=vmem, size = 0x9000, scoped, tag = 'internal scratch']
  #allocation2 [shape = 'f32[16,32]{1,0:T(8,128)}', space=vmem, size = 0x2000, scoped, tag = 'scratch operand']
  %s0 = inlined_call_operand.hbm [shape: bf16[16,32], index: 0, kind: input, shape index: {}]
  %s1 = inlined_call_operand.hbm [shape: bf16[32,32], index: 1, kind: input, shape index: {}]
  %s2 = inlined_call_operand.vmem [shape: f32[1,32], index: 2, kind: input, shape index: {}]
  %s3 = inlined_call_operand.hbm [shape: f32[16,32], index: 3, kind: output, shape index: {}]
  %s4 = sld [smem:[#allocation0]]
  $region38: #{tpu_custom_call.1} parent=0
    _
  %s6 = ssub.s32 1, %s4
  %s7 = scalar_select 0, %s6, %s4
  $region1: #{tpu_custom_call.1} parent=0
    #allocation3 [shape = 'u8[4096]{0}', space=vmem, size = 0x1000, scoped, tag = 'input window, operand 0, single buffered']
    #allocation4 [shape = 's32[1]{0}', space=sflag, size = 0x4, scoped, tag = 'scoped memory for tpu_custom_call.1']
    #allocation5 [shape = 's32[1]{0}', space=sflag, size = 0x4, scoped, tag = 'scoped memory for tpu_custom_call.1']
    #allocation6 [shape = 'u8[8192]{0}', space=vmem, size = 0x2000, scoped, tag = 'input window, operand 1, single buffered']
    #allocation7 [shape = 's32[1]{0}', space=sflag, size = 0x4, scoped, tag = 'scoped memory for tpu_custom_call.1']
    #allocation8 [shape = 'u8[8192]{0}', space=vmem, size = 0x2000, scoped, tag = 'output window, operand 0, single buffered']
    %8 = vsyncpa [#allocation4], 0
    %9 = vsyncpa [#allocation7], 0
    %10 = vsyncpa [#allocation5], 0
    // Predicated region
    $region2: #{tpu_custom_call.1} parent=1 // pred_check
      _
    $region3: #{tpu_custom_call.1} parent=1 // pred_check_branch
      %12 = sbr.rel (0) target = $region5
    $region4: #{tpu_custom_call.1} parent=1 // pred_region
      %14 = vsyncadd [#allocation4], 0
      %s15 = sshll.u32 %s0, 4
      %s16 = int_to_ptr.hbm [resolvable:$true] %s15
      %s17 = sshll.u32 [#allocation3], 4
      %s18 = int_to_ptr.vmem [resolvable:$true] %s17
      %23 = dma.hbm_to_vmem [thread:$0]  %s16, 128, %s18, [#allocation4], 64, 64, 4
    $region5: #{tpu_custom_call.1} parent=1 // pred_fallthru
      _
    // Predicated region
    $region6: #{tpu_custom_call.1} parent=1 // pred_check
      _
    $region7: #{tpu_custom_call.1} parent=1 // pred_check_branch
      %25 = sbr.rel (0) target = $region9
    $region8: #{tpu_custom_call.1} parent=1 // pred_region
      %27 = vsyncadd [#allocation7], 0
      %s28 = sshll.u32 %s1, 4
      %s29 = int_to_ptr.hbm [resolvable:$true] %s28
      %s30 = sshll.u32 [#allocation6], 4
      %s31 = int_to_ptr.vmem [resolvable:$true] %s30
      %36 = dma.hbm_to_vmem [thread:$0]  %s29, 256, %s31, [#allocation7], 64, 64, 4
    $region9: #{tpu_custom_call.1} parent=1 // pred_fallthru
      _
    // Predicated region
    $region10: #{tpu_custom_call.1} parent=1 // pred_check
      _
    $region11: #{tpu_custom_call.1} parent=1 // pred_check_branch
      %38 = sbr.rel (0) target = $region13
    $region12: #{tpu_custom_call.1} parent=1 // pred_region
      _
    $region13: #{tpu_custom_call.1} parent=1 // pred_fallthru
      _
    // Predicated region
    $region14: #{tpu_custom_call.1} parent=1 // pred_check
      _
    $region15: #{tpu_custom_call.1} parent=1 // pred_check_branch
      %40 = sbr.rel (0) target = $region17
    $region16: #{tpu_custom_call.1} parent=1 // pred_region
      %42 = dma.done [#allocation4], 128
    $region17: #{tpu_custom_call.1} parent=1 // pred_fallthru
      _
    // Predicated region
    $region18: #{tpu_custom_call.1} parent=1 // pred_check
      _
    $region19: #{tpu_custom_call.1} parent=1 // pred_check_branch
      %44 = sbr.rel (0) target = $region21
    $region20: #{tpu_custom_call.1} parent=1 // pred_region
      %46 = dma.done [#allocation7], 256
    $region21: #{tpu_custom_call.1} parent=1 // pred_fallthru
      _
    %p48 = scmp.eq.s32.totalorder 0, 0
    // Predicated region
    $region22: #{tpu_custom_call.1} parent=1 // pred_check
      %p49 = pneg %p48
    $region23: #{tpu_custom_call.1} parent=1 // pred_check_branch
      %51 = sbr.rel (%p49) target = $region25
    $region24: #{tpu_custom_call.1} parent=1 // pred_region
      %vm52 = vcmask 261120
      %53 = vst.msk [vmem:[#allocation2] sm:$0xff] %vm52, 0.0
      %54 = vst.msk [vmem:[#allocation2 + $0x8] sm:$0xff] %vm52, 0.0
    $region25: #{tpu_custom_call.1} parent=1 // pred_fallthru
      _
    %v55 = vld [vmem:[#allocation2] sm:$0xff]
    %v56 = vld [vmem:[#allocation2 + $0x8] sm:$0xff]
    %v57 = vld [vmem:[#allocation3] sm:$0xf]
    %v58 = vld [vmem:[#allocation3 + $0x4] sm:$0xf]
    %v59 = vld [vmem:[#allocation6] sm:$0xf]
    %v60 = vld [vmem:[#allocation6 + $0x4] sm:$0xf]
    %v61 = vld [vmem:[#allocation6 + $0x8] sm:$0xf]
    %v62 = vld [vmem:[#allocation6 + $0xc] sm:$0xf]
    %v65 = vunpack.c.l.b16 %v57
    %v66 = vunpack.c.l.b16 %v58
    %v67 = vpack.c.b16 %v66, %v65
    %v72 = vunpack.c.l.b16 %v59
    %v73 = vunpack.c.l.b16 %v60
    %v74 = vunpack.c.l.b16 %v61
    %v75 = vunpack.c.l.b16 %v62
    %v76 = vpack.c.b16 %v73, %v72
    %v77 = vpack.c.b16 %v75, %v74
    %vm80 = vcmask 261120
    %v82 = vsel %vm80, %v67, 0
    %84 = vmatpush.bf16.msra.mxu0 0
    %85 = vmatpush.bf16.msra.mxu0 0
    %86 = vmatpush.bf16.msra.mxu0 0
    %87 = vmatpush.bf16.msra.mxu0 0
    %88 = vmatpush.bf16.msra.mxu0 0
    %89 = vmatpush.bf16.msra.mxu0 0
    %90 = vmatpush.bf16.msra.mxu0 %v77
    %91 = vmatpush.bf16.msra.mxu0 %v76
    %92 = vmatmul.bf16.gmra.mxu0 %v82
    %v93 = vpop.f32.mrf.mxu0
    %v94 = vadd.f32 0.0, %v93
    %v95 = vpop.f32.mrf.mxu0
    %v96 = vadd.f32 0.0, %v95
    %97 = vdwg.mxu0
    %v98 = vadd.f32 %v55, %v94
    %v99 = vadd.f32 %v56, %v96
    %100 = vst.msk [vmem:[#allocation2] sm:$0xff] %vm80, %v98
    %101 = vst.msk [vmem:[#allocation2 + $0x8] sm:$0xff] %vm80, %v99
    // Predicated region
    $region26: #{tpu_custom_call.1} parent=1 // pred_check
      %p102 = pneg %p48
    $region27: #{tpu_custom_call.1} parent=1 // pred_check_branch
      %104 = sbr.rel (%p102) target = $region29
    $region28: #{tpu_custom_call.1} parent=1 // pred_region
      %v105 = vld [vmem:[#allocation2] sm:$0xff]
      %v106 = vld [vmem:[#allocation2 + $0x8] sm:$0xff]
      %v107 = vld [vmem:[%s2] sm:$0x1]
      %v109 = vperm.slane %v107, 0
      %v111 = vadd.f32 %v105, %v109
      %v112 = vadd.f32 %v106, %v109
      %113 = vst.msk [vmem:[#allocation8] sm:$0xff] %vm80, %v111
      %114 = vst.msk [vmem:[#allocation8 + $0x8] sm:$0xff] %vm80, %v112
    $region29: #{tpu_custom_call.1} parent=1 // pred_fallthru
      _
    // Predicated region
    $region30: #{tpu_custom_call.1} parent=1 // pred_check
      _
    $region31: #{tpu_custom_call.1} parent=1 // pred_check_branch
      %116 = sbr.rel (0) target = $region33
    $region32: #{tpu_custom_call.1} parent=1 // pred_region
      %118 = vsyncadd [#allocation5], 0
      %s119 = sshll.u32 [#allocation8], 4
      %s120 = int_to_ptr.vmem [resolvable:$true] %s119
      %s121 = sshll.u32 %s3, 4
      %s122 = int_to_ptr.hbm [resolvable:$true] %s121
      %127 = dma.vmem_to_hbm [thread:$0]  %s120, 256, %s122, [#allocation5], 128, 128, 8
    $region33: #{tpu_custom_call.1} parent=1 // pred_fallthru
      _
    // Predicated region
    $region34: #{tpu_custom_call.1} parent=1 // pred_check
      _
    $region35: #{tpu_custom_call.1} parent=1 // pred_check_branch
      %129 = sbr.rel (0) target = $region37
    $region36: #{tpu_custom_call.1} parent=1 // pred_region
      %131 = dma.done [#allocation5], 256
    $region37: #{tpu_custom_call.1} parent=1 // pred_fallthru
      _
    %132 = vsyncpa [#allocation4], 1
    %133 = vsyncpa [#allocation7], 1
    %134 = vsyncpa [#allocation5], 1

</llo_original>
